<compile_context>
chip_gen: v7x
topology: tpu7x:2x2x1
jax: 0.10.0
libtpu: 0.0.40
codegen_flags: <defaults>
</compile_context>

<pallas_src>
import math

import jax
import jax.numpy as jnp
from jax.experimental import pallas as pl
from jax.experimental.pallas import tpu as pltpu


_SUBLANE_BY_ITEMSIZE = {4: 8, 2: 16, 1: 32}


def _round_up(x, m):
    return ((x + m - 1) // m) * m


def _vmem_budget_bytes():
    """Generation-aware VMEM budget for the kernel (per TensorCore)."""
    try:
        cap = int(pltpu.get_tpu_info().vmem_capacity_bytes)
    except Exception:
        cap = 64 * 1024 * 1024  # conservative (v7x per-TC size)
    # ~20% headroom for compiler scratch; never ask for more than 100 MiB.
    return min(int(cap * 0.8), 100 * 1024 * 1024)


def _pick_row_tile(rows_eff, in_width, out_width, in_itemsize, out_itemsize,
                   resident_bytes, sublane, target_tile_bytes, vmem_budget):
    """Row tile sized for ~target_tile_bytes of streamed data per grid step,
    clamped so resident weights + double-buffered in/out tiles fit VMEM."""
    in_lanes = _round_up(in_width, 128)
    out_lanes = _round_up(out_width, 128)
    tm = target_tile_bytes // (max(in_lanes, out_lanes) *
                               max(in_itemsize, out_itemsize))
    per_row = 2 * (in_lanes * in_itemsize + out_lanes * out_itemsize)  # 2x buffered
    avail = vmem_budget - resident_bytes - (2 << 20)
    if avail > per_row * sublane:
        tm = min(tm, avail // per_row)
    else:
        tm = sublane
    tm = max(sublane, (tm // sublane) * sublane)
    if tm >= rows_eff:
        tm = rows_eff  # single full-extent block (always a legal block shape)
    return int(tm)


def _temporal_decay_kernel(delta_ref, wt_ref, b_ref, out_ref):
    # delta_ref: (TM, F_in)    wt_ref: (F_in, F_out_eff)    b_ref: (1, F_out_eff)
    z = jnp.dot(delta_ref[...], wt_ref[...], preferred_element_type=jnp.float32)
    z = z + b_ref[...].astype(jnp.float32)
    out_ref[...] = jnp.exp(-jnp.maximum(z, 0.0)).astype(out_ref.dtype)


def _temporal_decay_diag_kernel(delta_ref, w_ref, b_ref, out_ref):
    # delta_ref: (TM, F_eff)    w_ref: (1, F_eff)    b_ref: (1, F_eff)
    z = (delta_ref[...].astype(jnp.float32) * w_ref[...].astype(jnp.float32)
         + b_ref[...].astype(jnp.float32))
    out_ref[...] = jnp.exp(-jnp.maximum(z, 0.0)).astype(out_ref.dtype)


def temporal_decay(delta, W, b, *, diag=False, stream_dtype=None,
                   pad_dense_out=None, target_tile_bytes=2 * 1024 * 1024):
    """Forward pass of TemporalDecay.

    delta: [n_samples, n_steps, input_size]
    W:     [output_size, input_size]
    b:     [output_size]
    returns gamma: [n_samples, n_steps, output_size], values in (0, 1].
    """
    out_size, in_size = W.shape
    n_samples, n_steps, feat = delta.shape
    assert feat == in_size

    if stream_dtype is not None:
        delta = delta.astype(stream_dtype)
    x_dtype = delta.dtype
    itemsize = jnp.dtype(x_dtype).itemsize
    sublane = _SUBLANE_BY_ITEMSIZE.get(itemsize, 8)

    rows = n_samples * n_steps
    x2d = delta.reshape(rows, in_size)
    vmem_budget = _vmem_budget_bytes()

    if diag:
        # Elementwise path: only the diagonal of W matters; skip the MXU and
        # the O(F^2) weight DMA entirely.  Diag-path math stays f32 in-kernel.
        assert in_size == out_size
        w_diag = jnp.diagonal(W).astype(jnp.float32)
        lane_dense = (out_size < 128 and 128 % out_size == 0
                      and (rows * out_size) % 128 == 0)
        if lane_dense:
            # (rows, F) -> (rows*F/128, 128) is a free row-major reshape;
            # w/b repeat every F lanes, matching the packing.
            pack = 128 // out_size
            rows_eff = (rows * out_size) // 128
            feat_eff = 128
            x_arg = x2d.reshape(rows_eff, feat_eff)
            w_arg = jnp.tile(w_diag, pack).reshape(1, feat_eff)
            b_arg = jnp.tile(b.astype(jnp.float32), pack).reshape(1, feat_eff)
        else:
            rows_eff, feat_eff = rows, out_size
            x_arg = x2d
            w_arg = w_diag.reshape(1, feat_eff)
            b_arg = b.astype(jnp.float32).reshape(1, feat_eff)

        resident = 2 * _round_up(feat_eff, 128) * 4  # w + b rows
        tm = _pick_row_tile(rows_eff, feat_eff, feat_eff, itemsize, itemsize,
                            resident, sublane, target_tile_bytes, vmem_budget)
        grid = (pl.cdiv(rows_eff, tm),)

        cost = pl.CostEstimate(
            flops=2 * rows * out_size,
            transcendentals=rows * out_size,
            bytes_accessed=rows * out_size * 2 * itemsize + 2 * feat_eff * 4,
        )
        out2d = pl.pallas_call(
            _temporal_decay_diag_kernel,
            out_shape=jax.ShapeDtypeStruct((rows_eff, feat_eff), x_dtype),
            grid_spec=pltpu.PrefetchScalarGridSpec(
                num_scalar_prefetch=0,
                grid=grid,
                in_specs=[
                    pl.BlockSpec((tm, feat_eff), lambda i: (i, 0)),
                    pl.BlockSpec((1, feat_eff), lambda i: (0, 0)),
                    pl.BlockSpec((1, feat_eff), lambda i: (0, 0)),
                ],
                out_specs=pl.BlockSpec((tm, feat_eff), lambda i: (i, 0)),
            ),
            compiler_params=pltpu.CompilerParams(
                dimension_semantics=("parallel",),
                vmem_limit_bytes=vmem_budget,
            ),
            cost_estimate=cost,
        )(x_arg, w_arg, b_arg)
        return out2d.reshape(n_samples, n_steps, out_size)

    # ---------------- dense path (MXU) ----------------
    if pad_dense_out is None:
        # Lane-dense output store by default when out_size is not 128-aligned;
        # benchmark per-generation via pad_dense_out=False if the extra output
        # bytes ever dominate the masked-store savings.
        pad_dense_out = (out_size % 128) != 0
    out_eff = _round_up(out_size, 128) if pad_dense_out else out_size

    wt = W.T  # [in, out], stays VMEM-resident across the row grid
    bb = b
    if stream_dtype is not None:
        wt = wt.astype(stream_dtype)  # feeds the MXU natively (acc stays f32)
    if out_eff != out_size:
        wt = jnp.pad(wt, ((0, 0), (0, out_eff - out_size)))
        bb = jnp.pad(bb, (0, out_eff - out_size))
    b_arg = bb.astype(jnp.float32).reshape(1, out_eff)

    w_itemsize = jnp.dtype(wt.dtype).itemsize
    resident = (_round_up(in_size, 128) * _round_up(out_eff, 128) * w_itemsize
                + _round_up(out_eff, 128) * 4)
    # TODO(synk): for feature sizes beyond ~2K the resident W no longer fits a
    # v7x 64 MiB/TC budget alongside MiB-scale row tiles; add a K/N grid axis
    # ("arbitrary") with an f32 VMEM accumulator (or bf16 W) for that regime.
    tm = _pick_row_tile(rows, in_size, out_eff, itemsize, itemsize,
                        resident, sublane, target_tile_bytes, vmem_budget)
    grid = (pl.cdiv(rows, tm),)

    cost = pl.CostEstimate(
        flops=2 * rows * in_size * out_size,
        transcendentals=rows * out_size,
        bytes_accessed=(rows * in_size * itemsize + rows * out_eff * itemsize
                        + in_size * out_eff * w_itemsize + out_eff * 4),
    )
    out2d = pl.pallas_call(
        _temporal_decay_kernel,
        out_shape=jax.ShapeDtypeStruct((rows, out_eff), x_dtype),
        grid_spec=pltpu.PrefetchScalarGridSpec(
            num_scalar_prefetch=0,
            grid=grid,
            in_specs=[
                pl.BlockSpec((tm, in_size), lambda i: (i, 0)),
                pl.BlockSpec((in_size, out_eff), lambda i: (0, 0)),
                pl.BlockSpec((1, out_eff), lambda i: (0, 0)),
            ],
            out_specs=pl.BlockSpec((tm, out_eff), lambda i: (i, 0)),
        ),
        compiler_params=pltpu.CompilerParams(
            dimension_semantics=("parallel",),
            vmem_limit_bytes=vmem_budget,
        ),
        cost_estimate=cost,
    )(x2d, wt, b_arg)

    if out_eff != out_size:
        out2d = out2d[:, :out_size]  # lazy slice; downstream fusion absorbs it
    return out2d.reshape(n_samples, n_steps, out_size)


def init_params(key, input_size, output_size):
    # Matches PyTorch _reset_parameters: U(-1/sqrt(output_size), 1/sqrt(output_size))
    std_dev = 1.0 / math.sqrt(output_size)
    kw, kb = jax.random.split(key)
    W = jax.random.uniform(kw, (output_size, input_size),
                           minval=-std_dev, maxval=std_dev, dtype=jnp.float32)
    b = jax.random.uniform(kb, (output_size,),
                           minval=-std_dev, maxval=std_dev, dtype=jnp.float32)
    return W, b


if __name__ == "__main__":
    key = jax.random.PRNGKey(0)
    k_delta, k_params = jax.random.split(key)

    n_samples, n_steps, input_size, output_size = 2, 8, 32, 32
    delta = jax.random.uniform(k_delta, (n_samples, n_steps, input_size),
                               minval=0.0, maxval=5.0, dtype=jnp.float32)
    W, b = init_params(k_params, input_size, output_size)

    # Plain-JAX references.
    ref = jnp.exp(-jax.nn.relu(jnp.einsum("btf,of->bto", delta, W) + b))
    ref_diag = jnp.exp(-jax.nn.relu(
        jnp.einsum("btf,of->bto", delta, W * jnp.eye(input_size)) + b))

    # Dense path, lane-dense padded output (default).
    gamma = jax.block_until_ready(temporal_decay(delta, W, b, diag=False))
    assert gamma.shape == (n_samples, n_steps, output_size)
    assert jnp.allclose(gamma, ref, atol=1e-5, rtol=1e-5)

    # Dense path, non-padded (masked-store) variant kept for benchmarking.
    gamma_np = jax.block_until_ready(
        temporal_decay(delta, W, b, diag=False, pad_dense_out=False))
    assert jnp.allclose(gamma_np, ref, atol=1e-5, rtol=1e-5)

    # Diag path (lane-dense elementwise fast path).
    gamma_diag = jax.block_until_ready(temporal_decay(delta, W, b, diag=True))
    assert gamma_diag.shape == (n_samples, n_steps, output_size)
    assert jnp.allclose(gamma_diag, ref_diag, atol=1e-5, rtol=1e-5)

    # bf16 streaming mode (HBM transport halved; f32 accumulation in-kernel).
    gamma_bf16 = jax.block_until_ready(
        temporal_decay(delta, W, b, diag=False, stream_dtype=jnp.bfloat16))
    assert jnp.allclose(gamma_bf16.astype(jnp.float32), ref, atol=5e-2)
    gamma_diag_bf16 = jax.block_until_ready(
        temporal_decay(delta, W, b, diag=True, stream_dtype=jnp.bfloat16))
    assert jnp.allclose(gamma_diag_bf16.astype(jnp.float32), ref_diag, atol=5e-2)

    # Range check: gamma in (0, 1].
    assert bool(jnp.all(gamma > 0.0)) and bool(jnp.all(gamma <= 1.0))
    assert bool(jnp.all(gamma_diag > 0.0)) and bool(jnp.all(gamma_diag <= 1.0))

    print("KERNEL_OK")
</pallas_src>

<mosaic_0001>
module attributes {stable_mosaic.version = 11 : i64} {
  func.func @_temporal_decay_kernel(%arg0: i32, %arg1: memref<16x32xf32, #tpu.memory_space<vmem>>, %arg2: memref<32x128xf32, #tpu.memory_space<vmem>>, %arg3: memref<1x128xf32, #tpu.memory_space<vmem>>, %arg4: memref<16x128xf32, #tpu.memory_space<vmem>>) attributes {dimension_semantics = [#tpu.dimension_semantics<parallel>], iteration_bounds = array<i64: 1>, scalar_prefetch = 0 : i64, scratch_operands = 0 : i64, tpu.core_type = #tpu.core_type<tc>, window_params = [{transform_indices = @transform_0, window_bounds = array<i64: 16, 32>}, {pipeline_mode = #tpu.pipeline_mode<synchronous>, transform_indices = @transform_1, window_bounds = array<i64: 32, 128>}, {pipeline_mode = #tpu.pipeline_mode<synchronous>, transform_indices = @transform_2, window_bounds = array<i64: 1, 128>}, {transform_indices = @transform_3, window_bounds = array<i64: 16, 128>}]} {
    %c0 = arith.constant 0 : index
    %c0_0 = arith.constant 0 : index
    %0 = vector.load %arg1[%c0, %c0_0] : memref<16x32xf32, #tpu.memory_space<vmem>>, vector<16x32xf32>
    %c0_1 = arith.constant 0 : index
    %c0_2 = arith.constant 0 : index
    %1 = vector.load %arg2[%c0_1, %c0_2] : memref<32x128xf32, #tpu.memory_space<vmem>>, vector<32x128xf32>
    %cst = arith.constant dense<0.000000e+00> : vector<16x128xf32>
    %2 = tpu.matmul %0, %1, %cst {dimension_numbers = #tpu.dot_dimension_numbers<[1], [0], [0], [1], [0, 0, 1, 1], [], []>} : vector<16x32xf32>, vector<32x128xf32>, vector<16x128xf32> -> vector<16x128xf32>
    %c0_3 = arith.constant 0 : index
    %c0_4 = arith.constant 0 : index
    %3 = vector.load %arg3[%c0_3, %c0_4] : memref<1x128xf32, #tpu.memory_space<vmem>>, vector<1x128xf32>
    %4 = vector.broadcast %3 : vector<1x128xf32> to vector<16x128xf32>
    %5 = arith.addf %2, %4 : vector<16x128xf32>
    %cst_5 = arith.constant 0.000000e+00 : f32
    %6 = vector.broadcast %cst_5 : f32 to vector<16x128xf32>
    %7 = arith.maximumf %5, %6 : vector<16x128xf32>
    %cst_6 = arith.constant 0.000000e+00 : f32
    %8 = vector.broadcast %cst_6 : f32 to vector<16x128xf32>
    %9 = arith.subf %8, %7 : vector<16x128xf32>
    %10 = math.exp %9 : vector<16x128xf32>
    %c0_7 = arith.constant 0 : index
    %c0_8 = arith.constant 0 : index
    %11 = vector.load %arg4[%c0_7, %c0_8] : memref<16x128xf32, #tpu.memory_space<vmem>>, vector<16x128xf32>
    tpu.vector_store %arg4[%c0_7, %c0_8], %10 {strides = array<i32>} : memref<16x128xf32, #tpu.memory_space<vmem>>, vector<16x128xf32>,
    return
  }
  func.func @transform_0(%arg0: i32) -> (i32, i32) {
    %c0_i32 = arith.constant 0 : i32
    %c0_i32_0 = arith.constant 0 : i32
    return %arg0, %c0_i32 : i32, i32
  }
  func.func @transform_1(%arg0: i32) -> (i32, i32) {
    %c0_i32 = arith.constant 0 : i32
    %c0_i32_0 = arith.constant 0 : i32
    %c0_i32_1 = arith.constant 0 : i32
    return %c0_i32, %c0_i32_0 : i32, i32
  }
  func.func @transform_2(%arg0: i32) -> (i32, i32) {
    %c0_i32 = arith.constant 0 : i32
    %c0_i32_0 = arith.constant 0 : i32
    %c0_i32_1 = arith.constant 0 : i32
    return %c0_i32, %c0_i32_0 : i32, i32
  }
  func.func @transform_3(%arg0: i32) -> (i32, i32) {
    %c0_i32 = arith.constant 0 : i32
    %c0_i32_0 = arith.constant 0 : i32
    return %arg0, %c0_i32 : i32, i32
  }
}

</mosaic_0001>

<llo_original>
// kernel: tpu_custom_call.1
$region0: #{tpu_custom_call.1}
  #allocation0 [shape = 'u32[]', space=smem, size = 0x4, offset = 0x4, fixed_abs, tag = 'smem constant byte address 0x4 - core index']
  #allocation1 [shape = 'u32[144,128]{1,0:T(1,128)}', space=vmem, size = 0x12000, scoped, tag = 'internal scratch']
  %s0 = inlined_call_operand.hbm [shape: f32[16,32], index: 0, kind: input, shape index: {}]
  %s1 = inlined_call_operand.hbm [shape: f32[32,128], index: 1, kind: input, shape index: {}]
  %s2 = inlined_call_operand.vmem [shape: f32[1,128], index: 2, kind: input, shape index: {}]
  %s3 = inlined_call_operand.hbm [shape: f32[16,128], index: 3, kind: output, shape index: {}]
  %s4 = sld [smem:[#allocation0]]
  $region30: #{tpu_custom_call.1} parent=0
    _
  %s6 = ssub.s32 1, %s4
  %s7 = scalar_select 0, %s6, %s4
  $region1: #{tpu_custom_call.1} parent=0
    #allocation2 [shape = 'u8[8192]{0}', space=vmem, size = 0x2000, scoped, tag = 'input window, operand 0, single buffered']
    #allocation3 [shape = 's32[1]{0}', space=sflag, size = 0x4, scoped, tag = 'scoped memory for tpu_custom_call.1']
    #allocation4 [shape = 's32[1]{0}', space=sflag, size = 0x4, scoped, tag = 'scoped memory for tpu_custom_call.1']
    #allocation5 [shape = 'u8[16384]{0}', space=vmem, size = 0x4000, scoped, tag = 'input window, operand 1, single buffered']
    #allocation6 [shape = 's32[1]{0}', space=sflag, size = 0x4, scoped, tag = 'scoped memory for tpu_custom_call.1']
    #allocation7 [shape = 'u8[8192]{0}', space=vmem, size = 0x2000, scoped, tag = 'output window, operand 0, single buffered']
    %8 = vsyncpa [#allocation3], 0
    %9 = vsyncpa [#allocation6], 0
    %10 = vsyncpa [#allocation4], 0
    // Predicated region
    $region2: #{tpu_custom_call.1} parent=1 // pred_check
      _
    $region3: #{tpu_custom_call.1} parent=1 // pred_check_branch
      %12 = sbr.rel (0) target = $region5
    $region4: #{tpu_custom_call.1} parent=1 // pred_region
      %s14 = ssub.s32 256, 256
      %15 = vsyncadd [#allocation3], %s14
      %s16 = sshll.u32 [#allocation2], 4
      %s17 = int_to_ptr.vmem [resolvable:$true] %s16
      %22 = dma.hbm_to_vmem [thread:$0]  %s0, 256, %s17, [#allocation3], 128, 128, 8
    $region5: #{tpu_custom_call.1} parent=1 // pred_fallthru
      _
    // Predicated region
    $region6: #{tpu_custom_call.1} parent=1 // pred_check
      _
    $region7: #{tpu_custom_call.1} parent=1 // pred_check_branch
      %24 = sbr.rel (0) target = $region9
    $region8: #{tpu_custom_call.1} parent=1 // pred_region
      %s26 = ssub.s32 512, 512
      %27 = vsyncadd [#allocation6], %s26
      %s28 = sshll.u32 [#allocation5], 4
      %s29 = int_to_ptr.vmem [resolvable:$true] %s28
      %34 = dma.hbm_to_vmem [thread:$0]  %s1, 512, %s29, [#allocation6], 128, 128, 8
    $region9: #{tpu_custom_call.1} parent=1 // pred_fallthru
      _
    // Predicated region
    $region10: #{tpu_custom_call.1} parent=1 // pred_check
      _
    $region11: #{tpu_custom_call.1} parent=1 // pred_check_branch
      %36 = sbr.rel (0) target = $region13
    $region12: #{tpu_custom_call.1} parent=1 // pred_region
      _
    $region13: #{tpu_custom_call.1} parent=1 // pred_fallthru
      _
    // Predicated region
    $region14: #{tpu_custom_call.1} parent=1 // pred_check
      _
    $region15: #{tpu_custom_call.1} parent=1 // pred_check_branch
      %38 = sbr.rel (0) target = $region17
    $region16: #{tpu_custom_call.1} parent=1 // pred_region
      %39 = dma.done [#allocation3], 256
    $region17: #{tpu_custom_call.1} parent=1 // pred_fallthru
      _
    // Predicated region
    $region18: #{tpu_custom_call.1} parent=1 // pred_check
      _
    $region19: #{tpu_custom_call.1} parent=1 // pred_check_branch
      %41 = sbr.rel (0) target = $region21
    $region20: #{tpu_custom_call.1} parent=1 // pred_region
      %42 = dma.done [#allocation6], 512
    $region21: #{tpu_custom_call.1} parent=1 // pred_fallthru
      _
    %v43 = vld [vmem:[#allocation2] sm:$0xff]
    %v44 = vld [vmem:[#allocation2 + $0x8] sm:$0xff]
    %v45 = vld [vmem:[#allocation5] sm:$0xff]
    %v46 = vld [vmem:[#allocation5 + $0x8] sm:$0xff]
    %v47 = vld [vmem:[#allocation5 + $0x10] sm:$0xff]
    %v48 = vld [vmem:[#allocation5 + $0x18] sm:$0xff]
    %v49 = vld [vmem:[%s2] sm:$0x1]
    %v51 = vlaneseq
    %v52 = vshrl.u32 %v51, 7
    %v53 = vsub.s32 0, %v52
    %v54 = vrot.slane %v49, %v53
    %vm56 = vcmask 261120
    %v58 = vsel %vm56, %v43, 0
    %v61 = vsel %vm56, %v44, 0
    %63 = vmatprep.subr.mxu0 0.0
    %64 = vmatpush1.msra.mxu0 %v45
    %65 = vmatprep.subr.mxu0 0.0
    %66 = vmatpush1.msra.mxu0 %v46
    %67 = vmatprep.subr.mxu0 0.0
    %68 = vmatpush1.msra.mxu0 %v47
    %69 = vmatprep.subr.mxu0 0.0
    %70 = vmatpush1.msra.mxu0 %v48
    %71 = vmatprep.subr.mxu0 0.0
    %72 = vmatpush1.msra.mxu0 0.0
    %73 = vmatprep.subr.mxu0 0.0
    %74 = vmatpush1.msra.mxu0 0.0
    %75 = vmatprep.subr.mxu0 0.0
    %76 = vmatpush1.msra.mxu0 0.0
    %77 = vmatprep.subr.mxu0 0.0
    %78 = vmatpush1.msra.mxu0 0.0
    %79 = vmatprep.subr.mxu0 0.0
    %80 = vmatpush1.msra.mxu0 0.0
    %81 = vmatprep.subr.mxu0 0.0
    %82 = vmatpush1.msra.mxu0 0.0
    %83 = vmatprep.subr.mxu0 0.0
    %84 = vmatpush1.msra.mxu0 0.0
    %85 = vmatprep.subr.mxu0 0.0
    %86 = vmatpush1.msra.mxu0 0.0
    %87 = vmatprep.subr.mxu0 0.0
    %88 = vmatpush1.msra.mxu0 0.0
    %89 = vmatprep.subr.mxu0 0.0
    %90 = vmatpush1.msra.mxu0 0.0
    %91 = vmatprep.subr.mxu0 0.0
    %92 = vmatpush1.msra.mxu0 0.0
    %93 = vmatprep.subr.mxu0 0.0
    %94 = vmatpush1.msra.mxu0 0.0
    %95 = vmatprep.subr.mxu0 0.0
    %96 = vmatpush1.msra.mxu0 0.0
    %97 = vmatprep.subr.mxu0 0.0
    %98 = vmatpush1.msra.mxu0 0.0
    %99 = vmatprep.subr.mxu0 0.0
    %100 = vmatpush1.msra.mxu0 0.0
    %101 = vmatprep.subr.mxu0 0.0
    %102 = vmatpush1.msra.mxu0 0.0
    %103 = vmatprep.subr.mxu0 0.0
    %104 = vmatpush1.msra.mxu0 0.0
    %105 = vmatprep.subr.mxu0 0.0
    %106 = vmatpush1.msra.mxu0 0.0
    %107 = vmatprep.subr.mxu0 0.0
    %108 = vmatpush1.msra.mxu0 0.0
    %109 = vmatprep.subr.mxu0 0.0
    %110 = vmatpush1.msra.mxu0 0.0
    %111 = vmatprep.subr.mxu0 0.0
    %112 = vmatpush1.msra.mxu0 0.0
    %113 = vmatprep.subr.mxu0 0.0
    %114 = vmatpush1.msra.mxu0 0.0
    %115 = vmatprep.subr.mxu0 0.0
    %116 = vmatpush1.msra.mxu0 0.0
    %117 = vmatprep.subr.mxu0 0.0
    %118 = vmatpush1.msra.mxu0 0.0
    %119 = vmatprep.subr.mxu0 0.0
    %120 = vmatpush1.msra.mxu0 0.0
    %121 = vmatprep.subr.mxu0 0.0
    %122 = vmatpush1.msra.mxu0 0.0
    %123 = vmatprep.subr.mxu0 0.0
    %124 = vmatpush1.msra.mxu0 0.0
    %125 = vmatprep.subr.mxu0 0.0
    %126 = vmatpush1.msra.mxu0 0.0
    %127 = vmatprep.mubr.f32.mxu0 0.0
    %128 = vmatmul.mubr.f32.gmra.mrb[0].mxu0 %v58
    %v129 = vpop.f32.mrb[0].mxu0
    %v130 = vadd.f32 %v54, %v129
    %v131 = vpop.f32.mrb[0].mxu0
    %132 = vmatprep.mubr.f32.mxu0 0.0
    %133 = vmatmul.mubr.f32.gmra.mrb[0].mxu0 %v61
    %v134 = vpop.f32.mrb[0].mxu0
    %v135 = vadd.f32 %v54, %v134
    %v136 = vpop.f32.mrb[0].mxu0
    %137 = vdwg.mxu0
    %v138 = vmax.f32 %v130, 0.0
    %v139 = vmax.f32 %v135, 0.0
    %v140 = vsub.f32 0.0, %v138
    %v141 = vsub.f32 0.0, %v139
    %v142 = vmul.f32 %v140, 1.442695
    %v143 = vpow.pop %v142
    %v144 = vmul.f32 %v141, 1.442695
    %v145 = vpow.pop %v144
    %146 = vst [vmem:[#allocation7] sm:$0xff] %v143
    %147 = vst [vmem:[#allocation7 + $0x8] sm:$0xff] %v145
    // Predicated region
    $region22: #{tpu_custom_call.1} parent=1 // pred_check
      _
    $region23: #{tpu_custom_call.1} parent=1 // pred_check_branch
      %149 = sbr.rel (0) target = $region25
    $region24: #{tpu_custom_call.1} parent=1 // pred_region
      %s151 = ssub.s32 256, 256
      %152 = vsyncadd [#allocation4], %s151
      %s153 = sshll.u32 [#allocation7], 4
      %s154 = int_to_ptr.vmem [resolvable:$true] %s153
      %159 = dma.vmem_to_hbm [thread:$0]  %s154, 256, %s3, [#allocation4], 128, 128, 8
    $region25: #{tpu_custom_call.1} parent=1 // pred_fallthru
      _
    // Predicated region
    $region26: #{tpu_custom_call.1} parent=1 // pred_check
      _
    $region27: #{tpu_custom_call.1} parent=1 // pred_check_branch
      %161 = sbr.rel (0) target = $region29
    $region28: #{tpu_custom_call.1} parent=1 // pred_region
      %162 = dma.done [#allocation4], 256
    $region29: #{tpu_custom_call.1} parent=1 // pred_fallthru
      _
    %163 = vsyncpa [#allocation3], 1
    %164 = vsyncpa [#allocation6], 1
    %165 = vsyncpa [#allocation4], 1

</llo_original>
